<compile_context>
chip_gen: v7x
topology: tpu7x:2x2x1
jax: 0.10.0
libtpu: 0.0.40
codegen_flags: <defaults>
</compile_context>

<pallas_src>
import math
import functools

import jax
import jax.numpy as jnp
from jax.experimental import pallas as pl
from jax.experimental.pallas import tpu as pltpu


def _embedding_gather_kernel(ids_ref, emb_hbm, o_ref, gather_buf, sem, *,
                             tok_tile, scale):
    """Gather `tok_tile` embedding rows for this grid step and scale them.

    ids_ref:    (n_padded_tokens,) int32 in SMEM (scalar prefetch)
    emb_hbm:    (vocab, d_model) embedding table, left in HBM
    o_ref:      (tok_tile, d_model) output block in VMEM
    gather_buf: (tok_tile, d_model) VMEM scratch
    sem:        single DMA semaphore shared by all row copies of this tile
    """
    tile_idx = pl.program_id(0)
    base = tile_idx * tok_tile

    # Issue all row-gather DMAs for this tile; they proceed in parallel.
    @pl.loop(0, tok_tile)
    def _start(t):
        tok = ids_ref[base + t]
        pltpu.make_async_copy(
            emb_hbm.at[pl.ds(tok, 1), :],
            gather_buf.at[pl.ds(t, 1), :],
            sem,
        ).start()

    # Wait for all of them (every copy is the same size and signals `sem`).
    @pl.loop(0, tok_tile)
    def _wait(t):
        pltpu.make_async_copy(
            emb_hbm.at[pl.ds(0, 1), :],
            gather_buf.at[pl.ds(t, 1), :],
            sem,
        ).wait()

    # Scale by sqrt(d_model) and emit the whole tile with one dense store.
    o_ref[...] = (gather_buf[...].astype(jnp.float32)
                  * jnp.float32(scale)).astype(o_ref.dtype)


def input_embedding(token_ids, embedding_table, *, tok_tile=None):
    """token_ids: int array (...,); embedding_table: (vocab_size, d_model).

    Returns embedding_table[token_ids] * sqrt(d_model) with shape
    (*token_ids.shape, d_model).
    """
    vocab_size, d_model = embedding_table.shape
    scale = math.sqrt(d_model)

    orig_shape = token_ids.shape
    ids = token_ids.reshape(-1).astype(jnp.int32)
    n_tokens = ids.shape[0]

    itemsize = jnp.dtype(embedding_table.dtype).itemsize
    row_bytes = d_model * itemsize

    if tok_tile is None:
        # Target a ~512 KiB gathered tile, capped at 256 rows so we don't
        # issue thousands of tiny DMAs per grid step; sublane-align to 8.
        target_bytes = 512 * 1024
        tok_tile = max(8, min(256, target_bytes // max(1, row_bytes)))
        tok_tile = (tok_tile // 8) * 8
        # Don't tile wider than the (sublane-rounded) token count.
        tok_tile = min(tok_tile, max(8, ((n_tokens + 7) // 8) * 8))

    n_tiles = pl.cdiv(n_tokens, tok_tile)
    n_padded = n_tiles * tok_tile
    pad = n_padded - n_tokens
    if pad:
        # Only the tiny int32 id vector is padded (with a valid index 0);
        # the big activation tensor is never copied in the wrapper.
        ids = jnp.concatenate([ids, jnp.zeros((pad,), jnp.int32)], axis=0)

    out_dtype = embedding_table.dtype
    tile_bytes = tok_tile * d_model * itemsize
    # scratch + double-buffered output + headroom, clamped to a safe range
    # (well under v7x's 64 MiB physical VMEM per TensorCore).
    vmem_limit = int(min(48 << 20, max(16 << 20, 4 * tile_bytes + (2 << 20))))

    kernel = functools.partial(
        _embedding_gather_kernel, tok_tile=tok_tile, scale=scale)

    grid_spec = pltpu.PrefetchScalarGridSpec(
        num_scalar_prefetch=1,
        grid=(n_tiles,),
        in_specs=[pl.BlockSpec(memory_space=pl.ANY)],  # embedding stays in HBM
        out_specs=pl.BlockSpec((tok_tile, d_model), lambda i, ids_ref: (i, 0)),
        scratch_shapes=[
            pltpu.VMEM((tok_tile, d_model), embedding_table.dtype),
            pltpu.SemaphoreType.DMA(()),
        ],
    )

    out = pl.pallas_call(
        kernel,
        out_shape=jax.ShapeDtypeStruct((n_padded, d_model), out_dtype),
        grid_spec=grid_spec,
        compiler_params=pltpu.CompilerParams(
            dimension_semantics=("parallel",),
            vmem_limit_bytes=vmem_limit,
        ),
    )(ids, embedding_table)

    if pad:
        out = out[:n_tokens]
    return out.reshape(*orig_shape, d_model)


def input_embedding_ref(token_ids, embedding_table):
    d_model = embedding_table.shape[-1]
    return jnp.take(embedding_table, token_ids, axis=0) * math.sqrt(d_model)


if __name__ == "__main__":
    key = jax.random.PRNGKey(0)
    k_ids, k_emb = jax.random.split(key)

    batch, seq = 2, 8
    vocab_size, d_model = 64, 32

    token_ids = jax.random.randint(k_ids, (batch, seq), 0, vocab_size,
                                   dtype=jnp.int32)
    embedding_table = jax.random.normal(k_emb, (vocab_size, d_model),
                                        dtype=jnp.float32)

    out = input_embedding(token_ids, embedding_table)
    out = jax.block_until_ready(out)

    ref = input_embedding_ref(token_ids, embedding_table)
    assert out.shape == (batch, seq, d_model)
    assert jnp.allclose(out, ref, atol=1e-5, rtol=1e-5), "mismatch vs reference"

    print("KERNEL_OK")
</pallas_src>

<mosaic_0001>
module attributes {stable_mosaic.version = 11 : i64} {
  func.func @_embedding_gather_kernel(%arg0: i32, %arg1: memref<16xi32, #tpu.memory_space<smem>>, %arg2: memref<64x32xf32, #tpu.memory_space<any>>, %arg3: memref<16x32xf32, #tpu.memory_space<vmem>>, %arg4: memref<16x32xf32, #tpu.memory_space<vmem>>, %arg5: memref<!tpu.dma_semaphore, #tpu.memory_space<semaphore_mem>>) attributes {dimension_semantics = [#tpu.dimension_semantics<parallel>], iteration_bounds = array<i64: 1>, scalar_prefetch = 1 : i64, scratch_operands = 2 : i64, tpu.core_type = #tpu.core_type<tc>, window_params = [{}, {transform_indices = @transform_1, window_bounds = array<i64: 16, 32>}]} {
    %c16_i32 = arith.constant 16 : i32
    %0 = arith.muli %arg0, %c16_i32 : i32
    %c0_i32 = arith.constant 0 : i32
    %c16_i32_0 = arith.constant 16 : i32
    %1 = arith.addi %c0_i32, %c16_i32_0 : i32
    %c1_i32 = arith.constant 1 : i32
    scf.for %arg6 = %c0_i32 to %1 step %c1_i32  : i32 {
      %c1_i32_9 = arith.constant 1 : i32
      %7 = arith.muli %arg6, %c1_i32_9 : i32
      %c0_i32_10 = arith.constant 0 : i32
      %8 = arith.addi %c0_i32_10, %7 : i32
      %9 = arith.addi %0, %8 : i32
      %10 = arith.index_cast %9 : i32 to index
      %11 = memref.load %arg1[%10] : memref<16xi32, #tpu.memory_space<smem>>
      %c0_i32_11 = arith.constant 0 : i32
      %12 = tpu.memref_slice %arg2[%11, %c0_i32_11] : memref<64x32xf32, #tpu.memory_space<any>> -> memref<1x32xf32, #tpu.memory_space<any>>
      %c0_i32_12 = arith.constant 0 : i32
      %13 = tpu.memref_slice %arg4[%8, %c0_i32_12] : memref<16x32xf32, #tpu.memory_space<vmem>> -> memref<1x32xf32, #tpu.memory_space<vmem>>
      tpu.enqueue_dma source(%12 : memref<1x32xf32, #tpu.memory_space<any>>) target(%13 : memref<1x32xf32, #tpu.memory_space<vmem>>) target_semaphore(%arg5 : memref<!tpu.dma_semaphore, #tpu.memory_space<semaphore_mem>>)
    }
    %c16_i32_1 = arith.constant 16 : i32
    %c0_i32_2 = arith.constant 0 : i32
    %c16_i32_3 = arith.constant 16 : i32
    %2 = arith.addi %c0_i32_2, %c16_i32_3 : i32
    %c1_i32_4 = arith.constant 1 : i32
    scf.for %arg6 = %c0_i32_2 to %2 step %c1_i32_4  : i32 {
      %c1_i32_9 = arith.constant 1 : i32
      %7 = arith.muli %arg6, %c1_i32_9 : i32
      %c0_i32_10 = arith.constant 0 : i32
      %8 = arith.addi %c0_i32_10, %7 : i32
      %c0_i32_11 = arith.constant 0 : i32
      %c0_i32_12 = arith.constant 0 : i32
      %9 = tpu.memref_slice %arg2[%c0_i32_11, %c0_i32_12] : memref<64x32xf32, #tpu.memory_space<any>> -> memref<1x32xf32, #tpu.memory_space<any>>
      %c0_i32_13 = arith.constant 0 : i32
      %10 = tpu.memref_slice %arg4[%8, %c0_i32_13] : memref<16x32xf32, #tpu.memory_space<vmem>> -> memref<1x32xf32, #tpu.memory_space<vmem>>
      tpu.wait_dma2 semaphore(%arg5 : memref<!tpu.dma_semaphore, #tpu.memory_space<semaphore_mem>>) src(%9 : memref<1x32xf32, #tpu.memory_space<any>>) dst(%10 : memref<1x32xf32, #tpu.memory_space<vmem>>)
    }
    %c16_i32_5 = arith.constant 16 : i32
    %c0 = arith.constant 0 : index
    %c0_6 = arith.constant 0 : index
    %3 = vector.load %arg4[%c0, %c0_6] : memref<16x32xf32, #tpu.memory_space<vmem>>, vector<16x32xf32>
    %cst = arith.constant 5.65685415 : f32
    %4 = vector.broadcast %cst : f32 to vector<16x32xf32>
    %5 = arith.mulf %3, %4 : vector<16x32xf32>
    %c0_7 = arith.constant 0 : index
    %c0_8 = arith.constant 0 : index
    %6 = vector.load %arg3[%c0_7, %c0_8] : memref<16x32xf32, #tpu.memory_space<vmem>>, vector<16x32xf32>
    tpu.vector_store %arg3[%c0_7, %c0_8], %5 {strides = array<i32>} : memref<16x32xf32, #tpu.memory_space<vmem>>, vector<16x32xf32>,
    return
  }
  func.func @transform_1(%arg0: i32, %arg1: memref<16xi32, #tpu.memory_space<smem>>) -> (i32, i32) {
    %c0_i32 = arith.constant 0 : i32
    %c0_i32_0 = arith.constant 0 : i32
    return %arg0, %c0_i32 : i32, i32
  }
}

</mosaic_0001>

<llo_original>
// kernel: tpu_custom_call.1
$region0: #{tpu_custom_call.1}
  #allocation0 [shape = 'u32[]', space=smem, size = 0x4, offset = 0x4, fixed_abs, tag = 'smem constant byte address 0x4 - core index']
  #allocation1 [shape = 'u32[144,128]{1,0:T(1,128)}', space=vmem, size = 0x12000, scoped, tag = 'internal scratch']
  #allocation2 [shape = 'f32[16,32]{1,0:T(8,128)}', space=vmem, size = 0x2000, scoped, tag = 'scratch operand']
  #allocation3 [shape = 's32[1]{0}', space=sflag, size = 0x4, scoped, tag = 'scratch operand']
  #allocation4 [shape = 's32[1]{0}', space=sflag, size = 0x4, scoped, tag = 'scoped memory for tpu_custom_call.1']
  #allocation5 [shape = 'u8[512]{0}', space=smem, size = 0x200, scoped, tag = 'prefetched SMEM operand 0']
  #allocation8 [shape = 's32[]', space=sflag, size = 0x4, offset = 0, fixed_abs, tag = 'sflag constant byte address 0x0 - dummy sync flag']
  %s0 = inlined_call_operand.vmem [shape: s32[16], index: 0, kind: input, shape index: {}]
  %s1 = inlined_call_operand.vmem [shape: f32[64,32], index: 1, kind: input, shape index: {}]
  %s2 = inlined_call_operand.hbm [shape: f32[16,32], index: 2, kind: output, shape index: {}]
  %s3 = sld [smem:[#allocation0]]
  $region54: #{tpu_custom_call.1} parent=0
    _
  %s5 = ssub.s32 1, %s3
  %s6 = scalar_select 0, %s5, %s3
  %s7 = sshll.u32 %s0, 4
  %s8 = int_to_ptr.vmem [resolvable:$true] %s7
  %10 = dma.vmem_to_smem %s8, 16, [#allocation5], [#allocation4]
  %11 = dma.done [#allocation4], 16
  %12 = sfence
  $region1: #{tpu_custom_call.1} parent=0
    #allocation6 [shape = 'u8[8192]{0}', space=vmem, size = 0x2000, scoped, tag = 'output window, operand 0, single buffered']
    #allocation7 [shape = 's32[1]{0}', space=sflag, size = 0x4, scoped, tag = 'scoped memory for tpu_custom_call.1']
    %13 = vsyncpa [#allocation7], 0
    %s14 = smul.u32 0, 16
    loop: start=0, step=1, limit=16
    $region2: #{tpu_custom_call.1} parent=1 // loop_pre_header
      _
    $region3: #{tpu_custom_call.1} parent=1 // loop_header
      %s16 = sphi 0, %s20
      %p17 = scmp.ge.s32.totalorder %s16, 16
    $region4: #{tpu_custom_call.1} parent=1 // loop_header_branch
      %19 = sbr.rel (%p17) target = $region8
    $region5: #{tpu_custom_call.1} parent=1 // loop_body
      %s21 = sadd.s32 %s14, %s16
      %s22 = sld [smem:[#allocation5 + %s21]]
      %s23 = scalar_lea.vmem %s1, %s22
      %s24 = scalar_lea.vmem [#allocation2], %s16
      %p26 = scmp.lt.u32.totalorder 1, 8
      %p27 = pneg %p26
      // Predicated region
      $region9: #{tpu_custom_call.1} parent=5 // pred_check
        _
      $region10: #{tpu_custom_call.1} parent=5 // pred_check_branch
        %29 = sbr.rel (%p26) target = $region12
      $region11: #{tpu_custom_call.1} parent=5 // pred_region
        %s44 = sand.u32 1, 7
        %p45 = scmp.eq.s32.totalorder %s44, 0
        %p46 = pneg %p45
        // Predicated region
        $region24: #{tpu_custom_call.1} parent=11 // pred_check
          _
        $region25: #{tpu_custom_call.1} parent=11 // pred_check_branch
          %48 = sbr.rel (%p45) target = $region27
        $region26: #{tpu_custom_call.1} parent=11 // pred_region
          %s49 = sand.u32 1, 7
          %s50 = ssub.s32 1, %s49
          %s51 = scalar_lea.vmem %s23, %s50
          %s52 = ssub.s32 1, %s49
          %s53 = scalar_lea.vmem %s24, %s52 [#allocation2]
          %s54 = sshllo.u32 0, %s49
          loop: start=0, step=1, limit=1
          $region28: #{tpu_custom_call.1} parent=26 // loop_pre_header
            _
          $region29: #{tpu_custom_call.1} parent=26 // loop_header
            %s56 = sphi 0, %s60
            %p57 = scmp.ge.s32.totalorder %s56, 1
            %s61 = sphi %s51, %s51
            %s62 = sphi %s53, %s53
          $region30: #{tpu_custom_call.1} parent=26 // loop_header_branch
            %59 = sbr.rel (%p57) target = $region34
          $region31: #{tpu_custom_call.1} parent=26 // loop_body
            %v63 = vld [vmem:[%s61] sm:%s54]
            %64 = vst [vmem:[%s62] sm:%s54] %v63
          $region32: #{tpu_custom_call.1} parent=26 // loop_footer
            %s60 = sadd.s32 1, %s56
          $region33: #{tpu_custom_call.1} parent=26 // loop_footer_branch
            %55 = sbr.rel target = $region29
          $region34: #{tpu_custom_call.1} parent=26 // loop_exit
            _
        $region27: #{tpu_custom_call.1} parent=11 // pred_fallthru
          _
      $region12: #{tpu_custom_call.1} parent=5 // pred_fallthru
        _
      // Predicated region
      $region13: #{tpu_custom_call.1} parent=5 // pred_check
        %p30 = pneg %p26
      $region14: #{tpu_custom_call.1} parent=5 // pred_check_branch
        %32 = sbr.rel (%p30) target = $region16
      $region15: #{tpu_custom_call.1} parent=5 // pred_region
        %s33 = sshllo.u32 0, 1
        loop: start=0, step=1, limit=1
        $region17: #{tpu_custom_call.1} parent=15 // loop_pre_header
          _
        $region18: #{tpu_custom_call.1} parent=15 // loop_header
          %s35 = sphi 0, %s39
          %p36 = scmp.ge.s32.totalorder %s35, 1
          %s40 = sphi %s23, %s23
          %s41 = sphi %s24, %s24
        $region19: #{tpu_custom_call.1} parent=15 // loop_header_branch
          %38 = sbr.rel (%p36) target = $region23
        $region20: #{tpu_custom_call.1} parent=15 // loop_body
          %v42 = vld [vmem:[%s40] sm:%s33]
          %43 = vst [vmem:[%s41] sm:%s33] %v42
        $region21: #{tpu_custom_call.1} parent=15 // loop_footer
          %s39 = sadd.s32 1, %s35
        $region22: #{tpu_custom_call.1} parent=15 // loop_footer_branch
          %34 = sbr.rel target = $region18
        $region23: #{tpu_custom_call.1} parent=15 // loop_exit
          _
      $region16: #{tpu_custom_call.1} parent=5 // pred_fallthru
        _
      // Predicated region
      $region35: #{tpu_custom_call.1} parent=5 // pred_check
        _
      $region36: #{tpu_custom_call.1} parent=5 // pred_check_branch
        %67 = sbr.rel (0) target = $region38
      $region37: #{tpu_custom_call.1} parent=5 // pred_region
        %68 = vsyncadd [#allocation3], 16
      $region38: #{tpu_custom_call.1} parent=5 // pred_fallthru
        _
    $region6: #{tpu_custom_call.1} parent=1 // loop_footer
      %s20 = sadd.s32 1, %s16
    $region7: #{tpu_custom_call.1} parent=1 // loop_footer_branch
      %15 = sbr.rel target = $region3
    $region8: #{tpu_custom_call.1} parent=1 // loop_exit
      _
    loop: start=0, step=1, limit=16
    $region39: #{tpu_custom_call.1} parent=1 // loop_pre_header
      _
    $region40: #{tpu_custom_call.1} parent=1 // loop_header
      %s70 = sphi 0, %s74
      %p71 = scmp.ge.s32.totalorder %s70, 16
    $region41: #{tpu_custom_call.1} parent=1 // loop_header_branch
      %73 = sbr.rel (%p71) target = $region45
    $region42: #{tpu_custom_call.1} parent=1 // loop_body
      %s75 = smul.u32 1, 1
      %s76 = sshll.u32 %s75, 4
      %77 = dma.done [#allocation3], %s76
    $region43: #{tpu_custom_call.1} parent=1 // loop_footer
      %s74 = sadd.s32 1, %s70
    $region44: #{tpu_custom_call.1} parent=1 // loop_footer_branch
      %69 = sbr.rel target = $region40
    $region45: #{tpu_custom_call.1} parent=1 // loop_exit
      _
    %v78 = vld [vmem:[#allocation2] sm:$0xff]
    %v79 = vld [vmem:[#allocation2 + $0x8] sm:$0xff]
    %v80 = vmul.f32 %v78, 5.656854
    %v81 = vmul.f32 %v79, 5.656854
    %vm82 = vcmask 261120
    %83 = vst.msk [vmem:[#allocation6] sm:$0xff] %vm82, %v80
    %84 = vst.msk [vmem:[#allocation6 + $0x8] sm:$0xff] %vm82, %v81
    // Predicated region
    $region46: #{tpu_custom_call.1} parent=1 // pred_check
      _
    $region47: #{tpu_custom_call.1} parent=1 // pred_check_branch
      %86 = sbr.rel (0) target = $region49
    $region48: #{tpu_custom_call.1} parent=1 // pred_region
      %s88 = ssub.s32 256, 256
      %89 = vsyncadd [#allocation7], %s88
      %s90 = sshll.u32 [#allocation6], 4
      %s91 = int_to_ptr.vmem [resolvable:$true] %s90
      %96 = dma.vmem_to_hbm [thread:$0]  %s91, 256, %s2, [#allocation7], 128, 128, 8
    $region49: #{tpu_custom_call.1} parent=1 // pred_fallthru
      _
    // Predicated region
    $region50: #{tpu_custom_call.1} parent=1 // pred_check
      _
    $region51: #{tpu_custom_call.1} parent=1 // pred_check_branch
      %98 = sbr.rel (0) target = $region53
    $region52: #{tpu_custom_call.1} parent=1 // pred_region
      %99 = dma.done [#allocation7], 256
    $region53: #{tpu_custom_call.1} parent=1 // pred_fallthru
      _
    %100 = vsyncpa [#allocation7], 1
  %101 = vsyncmov [#allocation3]
  %s102 = vpop.sfrf %101
  %p103 = scmp.eq.s32.totalorder %s102, 0
  %p104 = pneg %p103
  %106 = shalt.err (%p104)

</llo_original>
